<compile_context>
chip_gen: v7x
topology: tpu7x:2x2x1
jax: 0.10.0
libtpu: 0.0.40
codegen_flags: <defaults>
</compile_context>

<pallas_src>
import jax
import jax.numpy as jnp
import numpy as np
from jax import lax
from jax.experimental import pallas as pl
from jax.experimental.pallas import tpu as pltpu

# Matches torch's masked_fill value (-finfo.max); applied with jnp.where (not additive).
_MASK_VALUE = -jnp.finfo(jnp.float32).max


# ----------------------------------------------------------------------------------
# Pass 1: QKV projection into head-padded (B, H, N, Dp) bf16 layout.
# ----------------------------------------------------------------------------------
def qkv_proj_kernel(x_ref, wq_ref, wk_ref, wv_ref, q_ref, k_ref, v_ref):
    xb = x_ref[0]                                                        # (TN, C) bf16
    q_ref[0, 0] = jnp.dot(xb, wq_ref[...],
                          preferred_element_type=jnp.float32).astype(q_ref.dtype)
    k_ref[0, 0] = jnp.dot(xb, wk_ref[...],
                          preferred_element_type=jnp.float32).astype(k_ref.dtype)
    v_ref[0, 0] = jnp.dot(xb, wv_ref[...],
                          preferred_element_type=jnp.float32).astype(v_ref.dtype)


# ----------------------------------------------------------------------------------
# Pass 2: flash attention (online softmax over key tiles) + fused output projection.
# Grid: (B, q_tiles, H, k_tiles); h/k are reduction axes carried in VMEM scratch.
# ----------------------------------------------------------------------------------
def attn_kernel(q_ref, k_ref, v_ref, mq_ref, mk_ref, wp_ref, bp_ref, o_ref,
                m_s, l_s, acc_s, proj_s):
    h = pl.program_id(2)
    ki = pl.program_id(3)
    nh = pl.num_programs(2)
    nk = pl.num_programs(3)

    # Projection accumulator: once per (batch, query-tile).
    @pl.when(jnp.logical_and(h == 0, ki == 0))
    def _():
        proj_s[...] = jnp.zeros_like(proj_s)

    # Online-softmax state: once per head.
    @pl.when(ki == 0)
    def _():
        m_s[...] = jnp.full_like(m_s, -jnp.inf)
        l_s[...] = jnp.zeros_like(l_s)
        acc_s[...] = jnp.zeros_like(acc_s)

    q = q_ref[0, 0]                                                      # (TQ, Dp) bf16
    k = k_ref[0, 0]                                                      # (TK, Dp) bf16
    v = v_ref[0, 0]                                                      # (TK, Dp) bf16

    # QK^T: contract on the (padded) head dim directly — no transpose materialized.
    s = lax.dot_general(q, k, (((1,), (1,)), ((), ())),
                        preferred_element_type=jnp.float32)              # (TQ, TK) f32

    # pair[i, j] = mask_q[i] * mask_k[j]; exact masked_fill semantics via where.
    pair = (mq_ref[0] * mk_ref[0]) != 0                                  # (TQ, TK) bool
    s = jnp.where(pair, s, _MASK_VALUE)

    # Online softmax update (f32).
    m_prev = m_s[...]
    m_new = jnp.maximum(m_prev, jnp.max(s, axis=-1, keepdims=True))
    alpha = jnp.exp(m_prev - m_new)
    p = jnp.exp(s - m_new)
    l_s[...] = alpha * l_s[...] + jnp.sum(p, axis=-1, keepdims=True)
    acc_s[...] = alpha * acc_s[...] + jnp.dot(p.astype(jnp.bfloat16), v,
                                              preferred_element_type=jnp.float32)
    m_s[...] = m_new

    # Head finished: normalize and fold into the output-projection accumulator.
    @pl.when(ki == nk - 1)
    def _():
        o_h = acc_s[...] * pl.reciprocal(l_s[...], approx=True)          # (TQ, Dp) f32
        proj_s[...] += jnp.dot(o_h.astype(jnp.bfloat16), wp_ref[0],
                               preferred_element_type=jnp.float32)       # (TQ, C) f32

    # All heads finished: add bias, write the output tile (single lane-dense store).
    @pl.when(jnp.logical_and(h == nh - 1, ki == nk - 1))
    def _():
        o_ref[0] = (proj_s[...] + bp_ref[...]).astype(o_ref.dtype)


# ----------------------------------------------------------------------------------
# Host wrapper.
# ----------------------------------------------------------------------------------
def _pick_tile(n, candidates):
    for c in candidates:
        if n % c == 0:
            return c
    return n


def _vmem_limit_bytes():
    # Generation-aware limit: 3/4 of physical VMEM (≈96 MiB on v5e/v6e, ≈48 MiB on v7x).
    try:
        cap = int(pltpu.get_tpu_info().vmem_capacity_bytes)
        return (cap * 3) // 4
    except Exception:
        return 32 * 1024 * 1024


def masked_attention(x, mask, w_qkv, w_proj, b_proj, *, num_heads):
    """x: (B, N, C) f32; mask: (B, N) bool/int (1 = keep).
    Weights use PyTorch nn.Linear layouts: w_qkv (3C, C) [no bias], w_proj (C, C), b_proj (C,)."""
    B, N, C = x.shape
    assert C % num_heads == 0
    D = C // num_heads
    Dp = ((D + 127) // 128) * 128                 # head dim padded to 128-lane multiple
    scale = D ** (-0.5)

    vmem_limit = _vmem_limit_bytes()

    # bf16 activations for HBM traffic / MXU operands; f32 accumulation in-kernel.
    x_bf = x.astype(jnp.bfloat16)

    # Host-side weight prep: split qkv, fold softmax scale into W_q, pre-transpose so the
    # kernel computes x @ W (nn.Linear is x @ W.T), pad each head's columns to Dp lanes.
    w_qkv_t = jnp.transpose(w_qkv)                # (C, 3C), columns ordered [q | k | v]

    def pack_qkv_w(block, s=1.0):                 # (C, C) -> (C, H*Dp) bf16, zero-padded
        wt = (block * s).reshape(C, num_heads, D)
        wp_ = jnp.zeros((C, num_heads, Dp), dtype=block.dtype).at[:, :, :D].set(wt)
        return wp_.reshape(C, num_heads * Dp).astype(jnp.bfloat16)

    wq = pack_qkv_w(w_qkv_t[:, 0 * C:1 * C], scale)
    wk = pack_qkv_w(w_qkv_t[:, 1 * C:2 * C])
    wv = pack_qkv_w(w_qkv_t[:, 2 * C:3 * C])

    # W_proj^T split per head and zero-padded along the (input) head dim: (H, Dp, C).
    wpt = jnp.transpose(w_proj).reshape(num_heads, D, C)
    wpt_pad = (jnp.zeros((num_heads, Dp, C), dtype=w_proj.dtype)
               .at[:, :D, :].set(wpt)).astype(jnp.bfloat16)
    bp = b_proj.reshape(1, C).astype(jnp.float32)

    # Masks pre-shaped so the kernel never transposes: (B, N, 1) and (B, 1, N).
    mask_q = mask.reshape(B, N, 1).astype(jnp.int32)
    mask_k = mask.reshape(B, 1, N).astype(jnp.int32)

    TN = _pick_tile(N, (256, 128))                # projection row tile
    TQ = _pick_tile(N, (256, 128))                # query tile
    TK = _pick_tile(N, (512, 256, 128))           # key tile (flash inner axis)

    # --- pass 1: Q / K / V projection -> (B, H, N, Dp) bf16 in HBM ---
    qkv_shape = jax.ShapeDtypeStruct((B, num_heads, N, Dp), jnp.bfloat16)
    q, k, v = pl.pallas_call(
        qkv_proj_kernel,
        out_shape=(qkv_shape, qkv_shape, qkv_shape),
        grid_spec=pltpu.PrefetchScalarGridSpec(
            num_scalar_prefetch=0,
            grid=(B, N // TN, num_heads),
            in_specs=[
                pl.BlockSpec((1, TN, C), lambda b, n, h: (b, n, 0)),   # x tile (resident over h)
                pl.BlockSpec((C, Dp), lambda b, n, h: (0, h)),         # W_q^T * scale, head h
                pl.BlockSpec((C, Dp), lambda b, n, h: (0, h)),         # W_k^T, head h
                pl.BlockSpec((C, Dp), lambda b, n, h: (0, h)),         # W_v^T, head h
            ],
            out_specs=[pl.BlockSpec((1, 1, TN, Dp), lambda b, n, h: (b, h, n, 0))] * 3),
        compiler_params=pltpu.CompilerParams(
            dimension_semantics=("parallel", "parallel", "arbitrary"),
            vmem_limit_bytes=vmem_limit),
    )(x_bf, wq, wk, wv)

    # --- pass 2: flash attention + fused output projection ---
    out = pl.pallas_call(
        attn_kernel,
        out_shape=jax.ShapeDtypeStruct((B, N, C), x.dtype),
        grid_spec=pltpu.PrefetchScalarGridSpec(
            num_scalar_prefetch=0,
            grid=(B, N // TQ, num_heads, N // TK),
            in_specs=[
                pl.BlockSpec((1, 1, TQ, Dp), lambda b, qi, h, ki: (b, h, qi, 0)),  # Q tile
                pl.BlockSpec((1, 1, TK, Dp), lambda b, qi, h, ki: (b, h, ki, 0)),  # K tile
                pl.BlockSpec((1, 1, TK, Dp), lambda b, qi, h, ki: (b, h, ki, 0)),  # V tile
                pl.BlockSpec((1, TQ, 1), lambda b, qi, h, ki: (b, qi, 0)),         # mask (queries)
                pl.BlockSpec((1, 1, TK), lambda b, qi, h, ki: (b, 0, ki)),         # mask (keys)
                pl.BlockSpec((1, Dp, C), lambda b, qi, h, ki: (h, 0, 0)),          # W_proj^T head h
                pl.BlockSpec((1, C), lambda b, qi, h, ki: (0, 0)),                 # b_proj
            ],
            out_specs=pl.BlockSpec((1, TQ, C), lambda b, qi, h, ki: (b, qi, 0)),
            scratch_shapes=[
                pltpu.VMEM((TQ, 1), jnp.float32),    # m (running max)
                pltpu.VMEM((TQ, 1), jnp.float32),    # l (running denom)
                pltpu.VMEM((TQ, Dp), jnp.float32),   # per-head accumulator
                pltpu.VMEM((TQ, C), jnp.float32),    # output-projection accumulator
            ]),
        compiler_params=pltpu.CompilerParams(
            # batch & query tiles independent -> parallel (megacore / 2-TC v7x);
            # head & key axes carry scratch -> arbitrary.
            dimension_semantics=("parallel", "parallel", "arbitrary", "arbitrary"),
            vmem_limit_bytes=vmem_limit),
    )(q, k, v, mask_q, mask_k, wpt_pad, bp)

    return out


# ----------------------------------------------------------------------------------
# Pure-JAX f32 reference mirroring the PyTorch forward exactly (eval mode).
# ----------------------------------------------------------------------------------
def masked_attention_ref(x, mask, w_qkv, w_proj, b_proj, *, num_heads):
    B, N, C = x.shape
    D = C // num_heads
    scale = D ** (-0.5)
    qkv = x @ w_qkv.T                                                # (B, N, 3C)
    qkv = qkv.reshape(B, N, 3, num_heads, D).transpose(2, 0, 3, 1, 4)
    q, k, v = qkv[0], qkv[1], qkv[2]                                 # (B, H, N, D)
    attn = jnp.einsum('bhnd,bhmd->bhnm', q, k) * scale
    m = mask.reshape(B, N).astype(bool)
    pair = m[:, None, :] & m[:, :, None]                             # (B, N, N)
    attn = jnp.where(pair[:, None, :, :], attn, -jnp.finfo(jnp.float32).max)
    attn = jax.nn.softmax(attn, axis=-1)
    out = jnp.einsum('bhnm,bhmd->bhnd', attn, v)
    out = out.transpose(0, 2, 1, 3).reshape(B, N, C)
    return out @ w_proj.T + b_proj.reshape(1, 1, C)


if __name__ == "__main__":
    B, N, C = 2, 8, 32
    num_heads = 8

    key = jax.random.PRNGKey(0)
    kx, kq, kp, kb, km = jax.random.split(key, 5)

    x = jax.random.normal(kx, (B, N, C), dtype=jnp.float32)

    # nn.Linear shapes: qkv (3C, C) without bias, proj (C, C) with bias.
    w_qkv = jax.random.normal(kq, (3 * C, C), dtype=jnp.float32) * 0.02
    w_proj = jax.random.normal(kp, (C, C), dtype=jnp.float32) * 0.02
    b_proj = jax.random.normal(kb, (C,), dtype=jnp.float32) * 0.02

    # Boolean mask (1 keep / 0 drop); keep at least one token per sequence.
    mask_bool = jax.random.uniform(km, (B, N)) > 0.3
    mask_bool = mask_bool.at[:, 0].set(True)

    out = masked_attention(x, mask_bool, w_qkv, w_proj, b_proj, num_heads=num_heads)
    out = jax.block_until_ready(out)

    ref = masked_attention_ref(x, mask_bool, w_qkv, w_proj, b_proj, num_heads=num_heads)
    # bf16 MXU operands + approx reciprocal -> looser tolerance vs the pure-f32 reference.
    np.testing.assert_allclose(np.asarray(out), np.asarray(ref), rtol=2e-2, atol=2e-2)

    print("KERNEL_OK")
</pallas_src>

<mosaic_0001>
module attributes {stable_mosaic.version = 11 : i64} {
  func.func @qkv_proj_kernel(%arg0: i32, %arg1: i32, %arg2: i32, %arg3: memref<1x8x32xbf16, #tpu.memory_space<vmem>>, %arg4: memref<32x128xbf16, #tpu.memory_space<vmem>>, %arg5: memref<32x128xbf16, #tpu.memory_space<vmem>>, %arg6: memref<32x128xbf16, #tpu.memory_space<vmem>>, %arg7: memref<1x1x8x128xbf16, #tpu.memory_space<vmem>>, %arg8: memref<1x1x8x128xbf16, #tpu.memory_space<vmem>>, %arg9: memref<1x1x8x128xbf16, #tpu.memory_space<vmem>>) attributes {dimension_semantics = [#tpu.dimension_semantics<parallel>, #tpu.dimension_semantics<parallel>, #tpu.dimension_semantics<arbitrary>], iteration_bounds = array<i64: 2, 1, 8>, scalar_prefetch = 0 : i64, scratch_operands = 0 : i64, tpu.core_type = #tpu.core_type<tc>, window_params = [{transform_indices = @transform_0, window_bounds = array<i64: 1, 8, 32>}, {transform_indices = @transform_1, window_bounds = array<i64: 32, 128>}, {transform_indices = @transform_2, window_bounds = array<i64: 32, 128>}, {transform_indices = @transform_3, window_bounds = array<i64: 32, 128>}, {transform_indices = @transform_4, window_bounds = array<i64: 1, 1, 8, 128>}, {transform_indices = @transform_5, window_bounds = array<i64: 1, 1, 8, 128>}, {transform_indices = @transform_6, window_bounds = array<i64: 1, 1, 8, 128>}]} {
    %c0 = arith.constant 0 : index
    %c0_0 = arith.constant 0 : index
    %c0_1 = arith.constant 0 : index
    %0 = vector.load %arg3[%c0, %c0_0, %c0_1] : memref<1x8x32xbf16, #tpu.memory_space<vmem>>, vector<1x8x32xbf16>
    %1 = vector.shape_cast %0 : vector<1x8x32xbf16> to vector<8x32xbf16>
    %c0_2 = arith.constant 0 : index
    %c0_3 = arith.constant 0 : index
    %2 = vector.load %arg4[%c0_2, %c0_3] : memref<32x128xbf16, #tpu.memory_space<vmem>>, vector<32x128xbf16>
    %cst = arith.constant dense<0.000000e+00> : vector<8x128xf32>
    %3 = tpu.matmul %1, %2, %cst {dimension_numbers = #tpu.dot_dimension_numbers<[1], [0], [0], [1], [0, 0, 1, 1], [], []>} : vector<8x32xbf16>, vector<32x128xbf16>, vector<8x128xf32> -> vector<8x128xf32>
    %4 = arith.truncf %3 : vector<8x128xf32> to vector<8x128xbf16>
    %c0_4 = arith.constant 0 : index
    %c0_5 = arith.constant 0 : index
    %c0_6 = arith.constant 0 : index
    %c0_7 = arith.constant 0 : index
    %5 = vector.load %arg7[%c0_4, %c0_5, %c0_6, %c0_7] : memref<1x1x8x128xbf16, #tpu.memory_space<vmem>>, vector<1x1x8x128xbf16>
    %6 = vector.shape_cast %5 : vector<1x1x8x128xbf16> to vector<8x128xbf16>
    %7 = vector.shape_cast %4 : vector<8x128xbf16> to vector<1x1x8x128xbf16>
    tpu.vector_store %arg7[%c0_4, %c0_5, %c0_6, %c0_7], %7 {strides = array<i32>} : memref<1x1x8x128xbf16, #tpu.memory_space<vmem>>, vector<1x1x8x128xbf16>,
    %c0_8 = arith.constant 0 : index
    %c0_9 = arith.constant 0 : index
    %8 = vector.load %arg5[%c0_8, %c0_9] : memref<32x128xbf16, #tpu.memory_space<vmem>>, vector<32x128xbf16>
    %cst_10 = arith.constant dense<0.000000e+00> : vector<8x128xf32>
    %9 = tpu.matmul %1, %8, %cst_10 {dimension_numbers = #tpu.dot_dimension_numbers<[1], [0], [0], [1], [0, 0, 1, 1], [], []>} : vector<8x32xbf16>, vector<32x128xbf16>, vector<8x128xf32> -> vector<8x128xf32>
    %10 = arith.truncf %9 : vector<8x128xf32> to vector<8x128xbf16>
    %c0_11 = arith.constant 0 : index
    %c0_12 = arith.constant 0 : index
    %c0_13 = arith.constant 0 : index
    %c0_14 = arith.constant 0 : index
    %11 = vector.load %arg8[%c0_11, %c0_12, %c0_13, %c0_14] : memref<1x1x8x128xbf16, #tpu.memory_space<vmem>>, vector<1x1x8x128xbf16>
    %12 = vector.shape_cast %11 : vector<1x1x8x128xbf16> to vector<8x128xbf16>
    %13 = vector.shape_cast %10 : vector<8x128xbf16> to vector<1x1x8x128xbf16>
    tpu.vector_store %arg8[%c0_11, %c0_12, %c0_13, %c0_14], %13 {strides = array<i32>} : memref<1x1x8x128xbf16, #tpu.memory_space<vmem>>, vector<1x1x8x128xbf16>,
    %c0_15 = arith.constant 0 : index
    %c0_16 = arith.constant 0 : index
    %14 = vector.load %arg6[%c0_15, %c0_16] : memref<32x128xbf16, #tpu.memory_space<vmem>>, vector<32x128xbf16>
    %cst_17 = arith.constant dense<0.000000e+00> : vector<8x128xf32>
    %15 = tpu.matmul %1, %14, %cst_17 {dimension_numbers = #tpu.dot_dimension_numbers<[1], [0], [0], [1], [0, 0, 1, 1], [], []>} : vector<8x32xbf16>, vector<32x128xbf16>, vector<8x128xf32> -> vector<8x128xf32>
    %16 = arith.truncf %15 : vector<8x128xf32> to vector<8x128xbf16>
    %c0_18 = arith.constant 0 : index
    %c0_19 = arith.constant 0 : index
    %c0_20 = arith.constant 0 : index
    %c0_21 = arith.constant 0 : index
    %17 = vector.load %arg9[%c0_18, %c0_19, %c0_20, %c0_21] : memref<1x1x8x128xbf16, #tpu.memory_space<vmem>>, vector<1x1x8x128xbf16>
    %18 = vector.shape_cast %17 : vector<1x1x8x128xbf16> to vector<8x128xbf16>
    %19 = vector.shape_cast %16 : vector<8x128xbf16> to vector<1x1x8x128xbf16>
    tpu.vector_store %arg9[%c0_18, %c0_19, %c0_20, %c0_21], %19 {strides = array<i32>} : memref<1x1x8x128xbf16, #tpu.memory_space<vmem>>, vector<1x1x8x128xbf16>,
    return
  }
  func.func @transform_0(%arg0: i32, %arg1: i32, %arg2: i32) -> (i32, i32, i32) {
    %c0_i32 = arith.constant 0 : i32
    %c0_i32_0 = arith.constant 0 : i32
    return %arg0, %arg1, %c0_i32 : i32, i32, i32
  }
  func.func @transform_1(%arg0: i32, %arg1: i32, %arg2: i32) -> (i32, i32) {
    %c0_i32 = arith.constant 0 : i32
    %c0_i32_0 = arith.constant 0 : i32
    return %c0_i32, %arg2 : i32, i32
  }
  func.func @transform_2(%arg0: i32, %arg1: i32, %arg2: i32) -> (i32, i32) {
    %c0_i32 = arith.constant 0 : i32
    %c0_i32_0 = arith.constant 0 : i32
    return %c0_i32, %arg2 : i32, i32
  }
  func.func @transform_3(%arg0: i32, %arg1: i32, %arg2: i32) -> (i32, i32) {
    %c0_i32 = arith.constant 0 : i32
    %c0_i32_0 = arith.constant 0 : i32
    return %c0_i32, %arg2 : i32, i32
  }
  func.func @transform_4(%arg0: i32, %arg1: i32, %arg2: i32) -> (i32, i32, i32, i32) {
    %c0_i32 = arith.constant 0 : i32
    %c0_i32_0 = arith.constant 0 : i32
    return %arg0, %arg2, %arg1, %c0_i32 : i32, i32, i32, i32
  }
  func.func @transform_5(%arg0: i32, %arg1: i32, %arg2: i32) -> (i32, i32, i32, i32) {
    %c0_i32 = arith.constant 0 : i32
    %c0_i32_0 = arith.constant 0 : i32
    return %arg0, %arg2, %arg1, %c0_i32 : i32, i32, i32, i32
  }
  func.func @transform_6(%arg0: i32, %arg1: i32, %arg2: i32) -> (i32, i32, i32, i32) {
    %c0_i32 = arith.constant 0 : i32
    %c0_i32_0 = arith.constant 0 : i32
    return %arg0, %arg2, %arg1, %c0_i32 : i32, i32, i32, i32
  }
}

</mosaic_0001>

<llo_original>
// kernel: tpu_custom_call.1
$region0: #{tpu_custom_call.1}
  #allocation0 [shape = 'u32[]', space=smem, size = 0x4, offset = 0x4, fixed_abs, tag = 'smem constant byte address 0x4 - core index']
  #allocation1 [shape = 'u32[144,128]{1,0:T(1,128)}', space=vmem, size = 0x12000, scoped, tag = 'internal scratch']
  %s0 = inlined_call_operand.hbm [shape: bf16[2,8,32], index: 0, kind: input, shape index: {}]
  %s1 = inlined_call_operand.hbm [shape: bf16[32,1024], index: 1, kind: input, shape index: {}]
  %s2 = inlined_call_operand.hbm [shape: bf16[32,1024], index: 2, kind: input, shape index: {}]
  %s3 = inlined_call_operand.hbm [shape: bf16[32,1024], index: 3, kind: input, shape index: {}]
  %s4 = inlined_call_operand.hbm [shape: bf16[2,8,8,128], index: 4, kind: output, shape index: {0}]
  %s5 = inlined_call_operand.hbm [shape: bf16[2,8,8,128], index: 5, kind: output, shape index: {1}]
  %s6 = inlined_call_operand.hbm [shape: bf16[2,8,8,128], index: 6, kind: output, shape index: {2}]
  %7 = xla_tuple %s4, %s5, %s6
  %s8 = sld [smem:[#allocation0]]
  $region81: #{tpu_custom_call.1} parent=0
    _
  %s10 = ssub.s32 1, %s8
  %s11 = scalar_select 0, %s10, %s8
  $region1: #{tpu_custom_call.1} parent=0
    #allocation2 [shape = 'u8[4096]{0}', space=vmem, size = 0x1000, scoped, tag = 'input window, operand 0']
    #allocation3 [shape = 's32[2]{0}', space=sflag, size = 0x8, scoped, tag = 'scoped memory for tpu_custom_call.1']
    #allocation4 [shape = 's32[2]{0}', space=sflag, size = 0x8, scoped, tag = 'scoped memory for tpu_custom_call.1']
    #allocation5 [shape = 'u8[16384]{0}', space=vmem, size = 0x4000, scoped, tag = 'input window, operand 1']
    #allocation6 [shape = 's32[2]{0}', space=sflag, size = 0x8, scoped, tag = 'scoped memory for tpu_custom_call.1']
    #allocation7 [shape = 'u8[16384]{0}', space=vmem, size = 0x4000, scoped, tag = 'input window, operand 2']
    #allocation8 [shape = 'u8[16384]{0}', space=vmem, size = 0x4000, scoped, tag = 'input window, operand 3']
    #allocation9 [shape = 's32[2]{0}', space=sflag, size = 0x8, scoped, tag = 'scoped memory for tpu_custom_call.1']
    #allocation10 [shape = 'u8[4096]{0}', space=vmem, size = 0x1000, scoped, tag = 'output window, operand 0']
    #allocation11 [shape = 'u8[4096]{0}', space=vmem, size = 0x1000, scoped, tag = 'output window, operand 1']
    #allocation12 [shape = 's32[2]{0}', space=sflag, size = 0x8, scoped, tag = 'scoped memory for tpu_custom_call.1']
    #allocation13 [shape = 'u8[4096]{0}', space=vmem, size = 0x1000, scoped, tag = 'output window, operand 2']
    %12 = vsyncpa [#allocation3], 0
    %s13 = scalar_lea.sflag [#allocation3], 1
    %14 = vsyncpa %s13, 0
    %15 = vsyncpa [#allocation6], 0
    %s16 = scalar_lea.sflag [#allocation6], 1
    %17 = vsyncpa %s16, 0
    %18 = vsyncpa [#allocation9], 0
    %s19 = scalar_lea.sflag [#allocation9], 1
    %20 = vsyncpa %s19, 0
    %21 = vsyncpa [#allocation4], 0
    %s22 = scalar_lea.sflag [#allocation4], 1
    %23 = vsyncpa %s22, 0
    %24 = vsyncpa [#allocation12], 0
    %s25 = scalar_lea.sflag [#allocation12], 1
    %26 = vsyncpa %s25, 0
    loop: start=0, step=1, limit=18
    $region2: #{tpu_custom_call.1} parent=1 // loop_pre_header
      _
    $region3: #{tpu_custom_call.1} parent=1 // loop_header
      %s28 = sphi 0, %s32
      %p29 = scmp.ge.s32.totalorder %s28, 18
      %s35 = sphi 0, %s54
      %s36 = sphi 0, %s50
      %s37 = sphi 0, %s46
      %s38 = sphi 0, %s35
      %s39 = sphi 0, %s36
      %s40 = sphi 0, %s37
      %s41 = sphi 0, %s38
      %s42 = sphi 0, %s39
      %s43 = sphi 0, %s40
      %s59 = sphi 0, %s61
      %s62 = sphi 0, %s59
      %s63 = sphi 0, %s62
      %s79 = sphi 0, %s63
      %s85 = sphi 0, %s87
      %s88 = sphi 0, %s85
      %s89 = sphi 0, %s88
      %s105 = sphi 0, %s89
      %s111 = sphi 0, %s113
      %s114 = sphi 0, %s111
      %s115 = sphi 0, %s114
      %s131 = sphi 0, %s115
      %s137 = sphi 0, %s139
      %s140 = sphi 0, %s137
      %s141 = sphi 0, %s140
      %s157 = sphi 0, %s141
      %s167 = sphi 0, %s169
      %s170 = sphi 0, %s167
      %s171 = sphi 0, %s170
      %s187 = sphi 0, %s171
      %s197 = sphi 0, %s199
      %s200 = sphi 0, %s197
      %s201 = sphi 0, %s200
      %s217 = sphi 0, %s201
      %s227 = sphi 0, %s229
      %s230 = sphi 0, %s227
      %s231 = sphi 0, %s230
      %s247 = sphi 0, %s231
    $region4: #{tpu_custom_call.1} parent=1 // loop_header_branch
      %31 = sbr.rel (%p29) target = $region8
    $region5: #{tpu_custom_call.1} parent=1 // loop_body
      %s33 = ssub.s32 %s28, 1
      %s34 = ssub.s32 %s28, 2
      %s44 = sadd.s32 1, %s37
      %p45 = scmp.ge.s32.totalorder %s44, 8
      %s46 = scalar_select %p45, 0, %s44
      %s47 = sadd.s32 1, %s36
      %s48 = scalar_select %p45, %s47, %s36
      %p49 = scmp.ge.s32.totalorder %s48, 1
      %s50 = scalar_select %p49, 0, %s48
      %s51 = sadd.s32 1, %s35
      %s52 = scalar_select %p49, %s51, %s35
      %p53 = scmp.ge.s32.totalorder %s52, 2
      %s54 = scalar_select %p53, 0, %s52
      %s55 = ssub.s32 %s35, %s54
      %s56 = ssub.s32 %s36, %s50
      %s57 = sor.u32 %s55, %s56
      %p58 = scmp.eq.s32.totalorder %s57, 0
      %s60 = sadd.s32 %s59, 1
      %s61 = scalar_select %p58, %s59, %s60
      %p64 = pneg %p58
      %p65 = scmp.eq.s32.totalorder %s28, 15
      %p66 = por %p64, %p65
      %p67 = scmp.ne.s32.totalorder %s59, %s62
      %p68 = scmp.eq.s32.totalorder %s28, 0
      %p69 = por %p67, %p68
      %p70 = scmp.ne.s32.totalorder %s59, %s62
      %p71 = scmp.eq.s32.totalorder %s33, 15
      %p72 = por %p70, %p71
      %p73 = scmp.ne.s32.totalorder %s62, %s63
      %p74 = scmp.eq.s32.totalorder %s33, 0
      %p75 = por %p73, %p74
      %p76 = scmp.ne.s32.totalorder %s62, %s63
      %p77 = scmp.eq.s32.totalorder %s34, 15
      %p78 = por %p76, %p77
      %p80 = scmp.ne.s32.totalorder %s63, %s79
      %p81 = scmp.eq.s32.totalorder %s34, 0
      %p82 = por %p80, %p81
      %s83 = ssub.s32 %s37, %s46
      %p84 = scmp.eq.s32.totalorder %s83, 0
      %s86 = sadd.s32 %s85, 1
      %s87 = scalar_select %p84, %s85, %s86
      %p90 = pneg %p84
      %p91 = scmp.eq.s32.totalorder %s28, 15
      %p92 = por %p90, %p91
      %p93 = scmp.ne.s32.totalorder %s85, %s88
      %p94 = scmp.eq.s32.totalorder %s28, 0
      %p95 = por %p93, %p94
      %p96 = scmp.ne.s32.totalorder %s85, %s88
      %p97 = scmp.eq.s32.totalorder %s33, 15
      %p98 = por %p96, %p97
      %p99 = scmp.ne.s32.totalorder %s88, %s89
      %p100 = scmp.eq.s32.totalorder %s33, 0
      %p101 = por %p99, %p100
      %p102 = scmp.ne.s32.totalorder %s88, %s89
      %p103 = scmp.eq.s32.totalorder %s34, 15
      %p104 = por %p102, %p103
      %p106 = scmp.ne.s32.totalorder %s89, %s105
      %p107 = scmp.eq.s32.totalorder %s34, 0
      %p108 = por %p106, %p107
      %s109 = ssub.s32 %s37, %s46
      %p110 = scmp.eq.s32.totalorder %s109, 0
      %s112 = sadd.s32 %s111, 1
      %s113 = scalar_select %p110, %s111, %s112
      %p116 = pneg %p110
      %p117 = scmp.eq.s32.totalorder %s28, 15
      %p118 = por %p116, %p117
      %p119 = scmp.ne.s32.totalorder %s111, %s114
      %p120 = scmp.eq.s32.totalorder %s28, 0
      %p121 = por %p119, %p120
      %p122 = scmp.ne.s32.totalorder %s111, %s114
      %p123 = scmp.eq.s32.totalorder %s33, 15
      %p124 = por %p122, %p123
      %p125 = scmp.ne.s32.totalorder %s114, %s115
      %p126 = scmp.eq.s32.totalorder %s33, 0
      %p127 = por %p125, %p126
      %p128 = scmp.ne.s32.totalorder %s114, %s115
      %p129 = scmp.eq.s32.totalorder %s34, 15
      %p130 = por %p128, %p129
      %p132 = scmp.ne.s32.totalorder %s115, %s131
      %p133 = scmp.eq.s32.totalorder %s34, 0
      %p134 = por %p132, %p133
      %s135 = ssub.s32 %s37, %s46
      %p136 = scmp.eq.s32.totalorder %s135, 0
      %s138 = sadd.s32 %s137, 1
      %s139 = scalar_select %p136, %s137, %s138
      %p142 = pneg %p136
      %p143 = scmp.eq.s32.totalorder %s28, 15
      %p144 = por %p142, %p143
      %p145 = scmp.ne.s32.totalorder %s137, %s140
      %p146 = scmp.eq.s32.totalorder %s28, 0
      %p147 = por %p145, %p146
      %p148 = scmp.ne.s32.totalorder %s137, %s140
      %p149 = scmp.eq.s32.totalorder %s33, 15
      %p150 = por %p148, %p149
      %p151 = scmp.ne.s32.totalorder %s140, %s141
      %p152 = scmp.eq.s32.totalorder %s33, 0
      %p153 = por %p151, %p152
      %p154 = scmp.ne.s32.totalorder %s140, %s141
      %p155 = scmp.eq.s32.totalorder %s34, 15
      %p156 = por %p154, %p155
      %p158 = scmp.ne.s32.totalorder %s141, %s157
      %p159 = scmp.eq.s32.totalorder %s34, 0
      %p160 = por %p158, %p159
      %s161 = ssub.s32 %s35, %s54
      %s162 = ssub.s32 %s37, %s46
      %s163 = sor.u32 %s161, %s162
      %s164 = ssub.s32 %s36, %s50
      %s165 = sor.u32 %s163, %s164
      %p166 = scmp.eq.s32.totalorder %s165, 0
      %s168 = sadd.s32 %s167, 1
      %s169 = scalar_select %p166, %s167, %s168
      %p172 = pneg %p166
      %p173 = scmp.eq.s32.totalorder %s28, 15
      %p174 = por %p172, %p173
      %p175 = scmp.ne.s32.totalorder %s167, %s170
      %p176 = scmp.eq.s32.totalorder %s28, 0
      %p177 = por %p175, %p176
      %p178 = scmp.ne.s32.totalorder %s167, %s170
      %p179 = scmp.eq.s32.totalorder %s33, 15
      %p180 = por %p178, %p179
      %p181 = scmp.ne.s32.totalorder %s170, %s171
      %p182 = scmp.eq.s32.totalorder %s33, 0
      %p183 = por %p181, %p182
      %p184 = scmp.ne.s32.totalorder %s170, %s171
      %p185 = scmp.eq.s32.totalorder %s34, 15
      %p186 = por %p184, %p185
      %p188 = scmp.ne.s32.totalorder %s171, %s187
      %p189 = scmp.eq.s32.totalorder %s34, 0
      %p190 = por %p188, %p189
      %s191 = ssub.s32 %s35, %s54
      %s192 = ssub.s32 %s37, %s46
      %s193 = sor.u32 %s191, %s192
      %s194 = ssub.s32 %s36, %s50
      %s195 = sor.u32 %s193, %s194
      %p196 = scmp.eq.s32.totalorder %s195, 0
      %s198 = sadd.s32 %s197, 1
      %s199 = scalar_select %p196, %s197, %s198
      %p202 = pneg %p196
      %p203 = scmp.eq.s32.totalorder %s28, 15
      %p204 = por %p202, %p203
      %p205 = scmp.ne.s32.totalorder %s197, %s200
      %p206 = scmp.eq.s32.totalorder %s28, 0
      %p207 = por %p205, %p206
      %p208 = scmp.ne.s32.totalorder %s197, %s200
      %p209 = scmp.eq.s32.totalorder %s33, 15
      %p210 = por %p208, %p209
      %p211 = scmp.ne.s32.totalorder %s200, %s201
      %p212 = scmp.eq.s32.totalorder %s33, 0
      %p213 = por %p211, %p212
      %p214 = scmp.ne.s32.totalorder %s200, %s201
      %p215 = scmp.eq.s32.totalorder %s34, 15
      %p216 = por %p214, %p215
      %p218 = scmp.ne.s32.totalorder %s201, %s217
      %p219 = scmp.eq.s32.totalorder %s34, 0
      %p220 = por %p218, %p219
      %s221 = ssub.s32 %s35, %s54
      %s222 = ssub.s32 %s37, %s46
      %s223 = sor.u32 %s221, %s222
      %s224 = ssub.s32 %s36, %s50
      %s225 = sor.u32 %s223, %s224
      %p226 = scmp.eq.s32.totalorder %s225, 0
      %s228 = sadd.s32 %s227, 1
      %s229 = scalar_select %p226, %s227, %s228
      %p232 = pneg %p226
      %p233 = scmp.eq.s32.totalorder %s28, 15
      %p234 = por %p232, %p233
      %p235 = scmp.ne.s32.totalorder %s227, %s230
      %p236 = scmp.eq.s32.totalorder %s28, 0
      %p237 = por %p235, %p236
      %p238 = scmp.ne.s32.totalorder %s227, %s230
      %p239 = scmp.eq.s32.totalorder %s33, 15
      %p240 = por %p238, %p239
      %p241 = scmp.ne.s32.totalorder %s230, %s231
      %p242 = scmp.eq.s32.totalorder %s33, 0
      %p243 = por %p241, %p242
      %p244 = scmp.ne.s32.totalorder %s230, %s231
      %p245 = scmp.eq.s32.totalorder %s34, 15
      %p246 = por %p244, %p245
      %p248 = scmp.ne.s32.totalorder %s231, %s247
      %p249 = scmp.eq.s32.totalorder %s34, 0
      %p250 = por %p248, %p249
      %p251 = scmp.le.s32.totalorder 1, %s28
      %p252 = scmp.lt.s32.totalorder %s28, 17
      %p253 = pnand %p251, %p252
      %p254 = pneg %p253
      // Predicated region
      $region9: #{tpu_custom_call.1} parent=5 // pred_check
        _
      $region10: #{tpu_custom_call.1} parent=5 // pred_check_branch
        %256 = sbr.rel (%p253) target = $region12
      $region11: #{tpu_custom_call.1} parent=5 // pred_region
        %s257 = ssub.s32 %s28, 1
      $region12: #{tpu_custom_call.1} parent=5 // pred_fallthru
        _
      %p258 = scmp.lt.s32.totalorder %s28, 16
      // Predicated region
      $region13: #{tpu_custom_call.1} parent=5 // pred_check
        %p259 = pneg %p258
      $region14: #{tpu_custom_call.1} parent=5 // pred_check_branch
        %261 = sbr.rel (%p259) target = $region16
      $region15: #{tpu_custom_call.1} parent=5 // pred_region
        // Predicated region
        $region17: #{tpu_custom_call.1} parent=15 // pred_check
          %p262 = pneg %p69
        $region18: #{tpu_custom_call.1} parent=15 // pred_check_branch
          %264 = sbr.rel (%p262) target = $region20
        $region19: #{tpu_custom_call.1} parent=15 // pred_region
          %s265 = sand.u32 %s59, 1
          %s266 = scalar_lea.sflag [#allocation3], %s265
          %s267 = sand.u32 %s59, 1
          %s268 = smul.addr %s267, 4
          %s269 = scalar_lea.vmem [#allocation2], %s268
          %s271 = ssub.s32 64, 64
          %272 = vsyncadd %s266, %s271
          %s273 = sadd.s32 %s36, %s35
          %s274 = smul.addr %s273, 64
          %s275 = scalar_lea.hbm %s0, %s274
          %s277 = sshll.u32 %s269, 4
          %s278 = int_to_ptr.vmem [resolvable:$true] %s277
          %280 = dma.hbm_to_vmem [thread:$0]  %s275, 64, %s278, %s266
        $region20: #{tpu_custom_call.1} parent=15 // pred_fallthru
          _
        // Predicated region
        $region21: #{tpu_custom_call.1} parent=15 // pred_check
          %p281 = pneg %p95
        $region22: #{tpu_custom_call.1} parent=15 // pred_check_branch
          %283 = sbr.rel (%p281) target = $region24
        $region23: #{tpu_custom_call.1} parent=15 // pred_region
          %s284 = sand.u32 %s28, 1
          %s285 = scalar_lea.sflag [#allocation6], %s284
          %s286 = sand.u32 %s85, 1
          %s287 = smul.addr %s286, 16
          %s288 = scalar_lea.vmem [#allocation5], %s287
          %s290 = ssub.s32 256, 256
          %291 = vsyncadd %s285, %s290
          %s292 = smul.addr %s37, 64
          %s293 = scalar_lea.hbm %s1, %s292
          %s294 = sshll.u32 %s288, 4
          %s295 = int_to_ptr.vmem [resolvable:$true] %s294
          %300 = dma.hbm_to_vmem [thread:$0]  %s293, 256, %s295, %s285, 512, 64, 4
        $region24: #{tpu_custom_call.1} parent=15 // pred_fallthru
          _
        // Predicated region
        $region25: #{tpu_custom_call.1} parent=15 // pred_check
          %p301 = pneg %p121
        $region26: #{tpu_custom_call.1} parent=15 // pred_check_branch
          %303 = sbr.rel (%p301) target = $region28
        $region27: #{tpu_custom_call.1} parent=15 // pred_region
          %s304 = sand.u32 %s28, 1
          %s305 = scalar_lea.sflag [#allocation6], %s304
          %s306 = sand.u32 %s111, 1
          %s307 = smul.addr %s306, 16
          %s308 = scalar_lea.vmem [#allocation7], %s307
          %s310 = ssub.s32 256, 256
          %311 = vsyncadd %s305, %s310
          %s312 = smul.addr %s37, 64
          %s313 = scalar_lea.hbm %s2, %s312
          %s314 = sshll.u32 %s308, 4
          %s315 = int_to_ptr.vmem [resolvable:$true] %s314
          %320 = dma.hbm_to_vmem [thread:$0]  %s313, 256, %s315, %s305, 512, 64, 4
        $region28: #{tpu_custom_call.1} parent=15 // pred_fallthru
          _
        // Predicated region
        $region29: #{tpu_custom_call.1} parent=15 // pred_check
          %p321 = pneg %p147
        $region30: #{tpu_custom_call.1} parent=15 // pred_check_branch
          %323 = sbr.rel (%p321) target = $region32
        $region31: #{tpu_custom_call.1} parent=15 // pred_region
          %s324 = sand.u32 %s137, 1
          %s325 = scalar_lea.sflag [#allocation9], %s324
          %s326 = sand.u32 %s137, 1
          %s327 = smul.addr %s326, 16
          %s328 = scalar_lea.vmem [#allocation8], %s327
          %s330 = ssub.s32 256, 256
          %331 = vsyncadd %s325, %s330
          %s332 = smul.addr %s37, 64
          %s333 = scalar_lea.hbm %s3, %s332
          %s334 = sshll.u32 %s328, 4
          %s335 = int_to_ptr.vmem [resolvable:$true] %s334
          %340 = dma.hbm_to_vmem [thread:$0]  %s333, 256, %s335, %s325, 512, 64, 4
        $region32: #{tpu_custom_call.1} parent=15 // pred_fallthru
          _
      $region16: #{tpu_custom_call.1} parent=5 // pred_fallthru
        _
      %p341 = scmp.le.s32.totalorder 1, %s28
      %p342 = scmp.lt.s32.totalorder %s28, 17
      %p343 = pnand %p341, %p342
      %p344 = pneg %p343
      // Predicated region
      $region33: #{tpu_custom_call.1} parent=5 // pred_check
        _
      $region34: #{tpu_custom_call.1} parent=5 // pred_check_branch
        %346 = sbr.rel (%p343) target = $region36
      $region35: #{tpu_custom_call.1} parent=5 // pred_region
        %s347 = ssub.s32 %s28, 1
        %s348 = sand.u32 %s62, 1
        %s349 = scalar_lea.sflag [#allocation3], %s348
        %s350 = sand.u32 %s62, 1
        %s351 = smul.addr %s350, 4
        %s352 = scalar_lea.vmem [#allocation2], %s351
        // Predicated region
        $region37: #{tpu_custom_call.1} parent=35 // pred_check
          %p353 = pneg %p75
        $region38: #{tpu_custom_call.1} parent=35 // pred_check_branch
          %355 = sbr.rel (%p353) target = $region40
        $region39: #{tpu_custom_call.1} parent=35 // pred_region
          %356 = dma.done %s349, 64
        $region40: #{tpu_custom_call.1} parent=35 // pred_fallthru
          _
        %s357 = sand.u32 %s33, 1
        %s358 = scalar_lea.sflag [#allocation6], %s357
        %s359 = sand.u32 %s88, 1
        %s360 = smul.addr %s359, 16
        %s361 = scalar_lea.vmem [#allocation5], %s360
        // Predicated region
        $region41: #{tpu_custom_call.1} parent=35 // pred_check
          %p362 = pneg %p101
        $region42: #{tpu_custom_call.1} parent=35 // pred_check_branch
          %364 = sbr.rel (%p362) target = $region44
        $region43: #{tpu_custom_call.1} parent=35 // pred_region
          %365 = dma.done %s358, 256
        $region44: #{tpu_custom_call.1} parent=35 // pred_fallthru
          _
        %s366 = sand.u32 %s33, 1
        %s367 = scalar_lea.sflag [#allocation6], %s366
        %s368 = sand.u32 %s114, 1
        %s369 = smul.addr %s368, 16
        %s370 = scalar_lea.vmem [#allocation7], %s369
        // Predicated region
        $region45: #{tpu_custom_call.1} parent=35 // pred_check
          %p371 = pneg %p127
        $region46: #{tpu_custom_call.1} parent=35 // pred_check_branch
          %373 = sbr.rel (%p371) target = $region48
        $region47: #{tpu_custom_call.1} parent=35 // pred_region
          %374 = dma.done %s367, 256
        $region48: #{tpu_custom_call.1} parent=35 // pred_fallthru
          _
        %s375 = sand.u32 %s140, 1
        %s376 = scalar_lea.sflag [#allocation9], %s375
        %s377 = sand.u32 %s140, 1
        %s378 = smul.addr %s377, 16
        %s379 = scalar_lea.vmem [#allocation8], %s378
        // Predicated region
        $region49: #{tpu_custom_call.1} parent=35 // pred_check
          %p380 = pneg %p153
        $region50: #{tpu_custom_call.1} parent=35 // pred_check_branch
          %382 = sbr.rel (%p380) target = $region52
        $region51: #{tpu_custom_call.1} parent=35 // pred_region
          %383 = dma.done %s376, 256
        $region52: #{tpu_custom_call.1} parent=35 // pred_fallthru
          _
        %s384 = sand.u32 %s62, 1
        %s385 = scalar_lea.sflag [#allocation3], %s384
        %s386 = sand.u32 %s62, 1
        %s387 = smul.addr %s386, 4
        %s388 = scalar_lea.vmem [#allocation2], %s387
        %p389 = pneg %p75
        %p390 = pneg %p72
        %s391 = sand.u32 %s33, 1
        %s392 = scalar_lea.sflag [#allocation6], %s391
        %s393 = sand.u32 %s88, 1
        %s394 = smul.addr %s393, 16
        %s395 = scalar_lea.vmem [#allocation5], %s394
        %p396 = pneg %p101
        %p397 = pneg %p98
        %s398 = sand.u32 %s33, 1
        %s399 = scalar_lea.sflag [#allocation6], %s398
        %s400 = sand.u32 %s114, 1
        %s401 = smul.addr %s400, 16
        %s402 = scalar_lea.vmem [#allocation7], %s401
        %p403 = pneg %p127
        %p404 = pneg %p124
        %s405 = sand.u32 %s140, 1
        %s406 = scalar_lea.sflag [#allocation9], %s405
        %s407 = sand.u32 %s140, 1
        %s408 = smul.addr %s407, 16
        %s409 = scalar_lea.vmem [#allocation8], %s408
        %p410 = pneg %p153
        %p411 = pneg %p150
        %p412 = pneg %p183
        %p413 = pneg %p180
        %s414 = sand.u32 %s170, 1
        %s415 = scalar_lea.sflag [#allocation4], %s414
        %s416 = sand.u32 %s170, 1
        %s417 = smul.addr %s416, 4
        %s418 = scalar_lea.vmem [#allocation10], %s417
        %p419 = pneg %p213
        %p420 = pneg %p210
        %s421 = sand.u32 %s33, 1
        %s422 = scalar_lea.sflag [#allocation12], %s421
        %s423 = sand.u32 %s200, 1
        %s424 = smul.addr %s423, 4
        %s425 = scalar_lea.vmem [#allocation11], %s424
        %p426 = pneg %p243
        %p427 = pneg %p240
        %s428 = sand.u32 %s33, 1
        %s429 = scalar_lea.sflag [#allocation12], %s428
        %s430 = sand.u32 %s230, 1
        %s431 = smul.addr %s430, 4
        %s432 = scalar_lea.vmem [#allocation13], %s431
        %v434 = vld [vmem:[%s352] sm:$0xf]
        %v435 = vld [vmem:[%s361] sm:$0xf]
        %v436 = vld [vmem:[%s361 + $0x4] sm:$0xf]
        %v437 = vld [vmem:[%s361 + $0x8] sm:$0xf]
        %v438 = vld [vmem:[%s361 + $0xc] sm:$0xf]
        %v443 = vunpack.c.l.b16 %v435
        %v444 = vunpack.c.l.b16 %v436
        %v445 = vunpack.c.l.b16 %v437
        %v446 = vunpack.c.l.b16 %v438
        %v447 = vpack.c.b16 %v444, %v443
        %v448 = vpack.c.b16 %v446, %v445
        %vm451 = vcmask 261120
        %v453 = vsel %vm451, %v434, 0
        %455 = vmatprep.subr.bf16.mxu0 0
        %456 = vmatpush1.bf16.msra.mxu0 %v447
        %457 = vmatprep.subr.bf16.mxu0 0
        %458 = vmatpush1.bf16.msra.mxu0 %v448
        %459 = vmatprep.subr.bf16.mxu0 0
        %460 = vmatpush1.bf16.msra.mxu0 0
        %461 = vmatprep.subr.bf16.mxu0 0
        %462 = vmatpush1.bf16.msra.mxu0 0
        %463 = vmatprep.subr.bf16.mxu0 0
        %464 = vmatpush1.bf16.msra.mxu0 0
        %465 = vmatprep.subr.bf16.mxu0 0
        %466 = vmatpush1.bf16.msra.mxu0 0
        %467 = vmatprep.subr.bf16.mxu0 0
        %468 = vmatpush1.bf16.msra.mxu0 0
        %469 = vmatprep.subr.bf16.mxu0 0
        %470 = vmatpush1.bf16.msra.mxu0 0
        %471 = vmatprep.subr.bf16.mxu0 0
        %472 = vmatpush1.bf16.msra.mxu0 0
        %473 = vmatprep.subr.bf16.mxu0 0
        %474 = vmatpush1.bf16.msra.mxu0 0
        %475 = vmatprep.subr.bf16.mxu0 0
        %476 = vmatpush1.bf16.msra.mxu0 0
        %477 = vmatprep.subr.bf16.mxu0 0
        %478 = vmatpush1.bf16.msra.mxu0 0
        %479 = vmatprep.subr.bf16.mxu0 0
        %480 = vmatpush1.bf16.msra.mxu0 0
        %481 = vmatprep.subr.bf16.mxu0 0
        %482 = vmatpush1.bf16.msra.mxu0 0
        %483 = vmatprep.subr.bf16.mxu0 0
        %484 = vmatpush1.bf16.msra.mxu0 0
        %485 = vmatprep.subr.bf16.mxu0 0
        %486 = vmatpush1.bf16.msra.mxu0 0
        %487 = vmatprep.mubr.bf16.mxu0 0
        %488 = vmatmul.mubr.bf16.gmra.mrb[0].mxu0 %v453
        %v489 = vpop.f32.mrb[0].mxu0
        %v490 = vadd.f32 0.0, %v489
        %v491 = vpop.f32.mrb[0].mxu0
        %v492 = vpop.f32.mrb[0].mxu0
        %v493 = vpop.f32.mrb[0].mxu0
        %494 = vdwg.mxu0
        %v495 = vpack.c.bf16 %v490, %v490
        %496 = vst [vmem:[%s418] sm:$0xf] %v495
        %v497 = vld [vmem:[%s370] sm:$0xf]
        %v498 = vld [vmem:[%s370 + $0x4] sm:$0xf]
        %v499 = vld [vmem:[%s370 + $0x8] sm:$0xf]
        %v500 = vld [vmem:[%s370 + $0xc] sm:$0xf]
        %v505 = vunpack.c.l.b16 %v497
        %v506 = vunpack.c.l.b16 %v498
        %v507 = vunpack.c.l.b16 %v499
        %v508 = vunpack.c.l.b16 %v500
        %v509 = vpack.c.b16 %v506, %v505
        %v510 = vpack.c.b16 %v508, %v507
        %513 = vmatprep.subr.bf16.mxu0 0
        %514 = vmatpush1.bf16.msra.mxu0 %v509
        %515 = vmatprep.subr.bf16.mxu0 0
        %516 = vmatpush1.bf16.msra.mxu0 %v510
        %517 = vmatprep.subr.bf16.mxu0 0
        %518 = vmatpush1.bf16.msra.mxu0 0
        %519 = vmatprep.subr.bf16.mxu0 0
        %520 = vmatpush1.bf16.msra.mxu0 0
        %521 = vmatprep.subr.bf16.mxu0 0
        %522 = vmatpush1.bf16.msra.mxu0 0
        %523 = vmatprep.subr.bf16.mxu0 0
        %524 = vmatpush1.bf16.msra.mxu0 0
        %525 = vmatprep.subr.bf16.mxu0 0
        %526 = vmatpush1.bf16.msra.mxu0 0
        %527 = vmatprep.subr.bf16.mxu0 0
        %528 = vmatpush1.bf16.msra.mxu0 0
        %529 = vmatprep.subr.bf16.mxu0 0
        %530 = vmatpush1.bf16.msra.mxu0 0
        %531 = vmatprep.subr.bf16.mxu0 0
        %532 = vmatpush1.bf16.msra.mxu0 0
        %533 = vmatprep.subr.bf16.mxu0 0
        %534 = vmatpush1.bf16.msra.mxu0 0
        %535 = vmatprep.subr.bf16.mxu0 0
        %536 = vmatpush1.bf16.msra.mxu0 0
        %537 = vmatprep.subr.bf16.mxu0 0
        %538 = vmatpush1.bf16.msra.mxu0 0
        %539 = vmatprep.subr.bf16.mxu0 0
        %540 = vmatpush1.bf16.msra.mxu0 0
        %541 = vmatprep.subr.bf16.mxu0 0
        %542 = vmatpush1.bf16.msra.mxu0 0
        %543 = vmatprep.subr.bf16.mxu0 0
        %544 = vmatpush1.bf16.msra.mxu0 0
        %545 = vmatprep.mubr.bf16.mxu0 0
        %546 = vmatmul.mubr.bf16.gmra.mrb[0].mxu0 %v453
        %v547 = vpop.f32.mrb[0].mxu0
        %v548 = vadd.f32 0.0, %v547
        %v549 = vpop.f32.mrb[0].mxu0
        %v550 = vpop.f32.mrb[0].mxu0
        %v551 = vpop.f32.mrb[0].mxu0
        %552 = vdwg.mxu0
        %v553 = vpack.c.bf16 %v548, %v548
        %554 = vst [vmem:[%s425] sm:$0xf] %v553
        %v555 = vld [vmem:[%s379] sm:$0xf]
        %v556 = vld [vmem:[%s379 + $0x4] sm:$0xf]
        %v557 = vld [vmem:[%s379 + $0x8] sm:$0xf]
        %v558 = vld [vmem:[%s379 + $0xc] sm:$0xf]
        %v563 = vunpack.c.l.b16 %v555
        %v564 = vunpack.c.l.b16 %v556
        %v565 = vunpack.c.l.b16 %v557
        %v566 = vunpack.c.l.b16 %v558
        %v567 = vpack.c.b16 %v564, %v563
        %v568 = vpack.c.b16 %v566, %v565
        %571 = vmatprep.subr.bf16.mxu0 0
        %572 = vmatpush1.bf16.msra.mxu0 %v567
        %573 = vmatprep.subr.bf16.mxu0 0
        %574 = vmatpush1.bf16.msra.mxu0 %v568
        %575 = vmatprep.subr.bf16.mxu0 0
        %576 = vmatpush1.bf16.msra.mxu0 0
        %577 = vmatprep.subr.bf16.mxu0 0
        %578 = vmatpush1.bf16.msra.mxu0 0
        %579 = vmatprep.subr.bf16.mxu0 0
        %580 = vmatpush1.bf16.msra.mxu0 0
        %581 = vmatprep.subr.bf16.mxu0 0
        %582 = vmatpush1.bf16.msra.mxu0 0
        %583 = vmatprep.subr.bf16.mxu0 0
        %584 = vmatpush1.bf16.msra.mxu0 0
        %585 = vmatprep.subr.bf16.mxu0 0
        %586 = vmatpush1.bf16.msra.mxu0 0
        %587 = vmatprep.subr.bf16.mxu0 0
        %588 = vmatpush1.bf16.msra.mxu0 0
        %589 = vmatprep.subr.bf16.mxu0 0
        %590 = vmatpush1.bf16.msra.mxu0 0
        %591 = vmatprep.subr.bf16.mxu0 0
        %592 = vmatpush1.bf16.msra.mxu0 0
        %593 = vmatprep.subr.bf16.mxu0 0
        %594 = vmatpush1.bf16.msra.mxu0 0
        %595 = vmatprep.subr.bf16.mxu0 0
        %596 = vmatpush1.bf16.msra.mxu0 0
        %597 = vmatprep.subr.bf16.mxu0 0
        %598 = vmatpush1.bf16.msra.mxu0 0
        %599 = vmatprep.subr.bf16.mxu0 0
        %600 = vmatpush1.bf16.msra.mxu0 0
        %601 = vmatprep.subr.bf16.mxu0 0
        %602 = vmatpush1.bf16.msra.mxu0 0
        %603 = vmatprep.mubr.bf16.mxu0 0
        %604 = vmatmul.mubr.bf16.gmra.mrb[0].mxu0 %v453
        %v605 = vpop.f32.mrb[0].mxu0
        %v606 = vadd.f32 0.0, %v605
        %v607 = vpop.f32.mrb[0].mxu0
        %v608 = vpop.f32.mrb[0].mxu0
        %v609 = vpop.f32.mrb[0].mxu0
        %610 = vdwg.mxu0
        %v611 = vpack.c.bf16 %v606, %v606
        %612 = vst [vmem:[%s432] sm:$0xf] %v611
        %s613 = sand.u32 %s170, 1
        %s614 = scalar_lea.sflag [#allocation4], %s613
        %s615 = sand.u32 %s170, 1
        %s616 = smul.addr %s615, 4
        %s617 = scalar_lea.vmem [#allocation10], %s616
        %s618 = sand.u32 %s33, 1
        %s619 = scalar_lea.sflag [#allocation12], %s618
        %s620 = sand.u32 %s200, 1
        %s621 = smul.addr %s620, 4
        %s622 = scalar_lea.vmem [#allocation11], %s621
        %s623 = sand.u32 %s33, 1
        %s624 = scalar_lea.sflag [#allocation12], %s623
        %s625 = sand.u32 %s230, 1
        %s626 = smul.addr %s625, 4
        %s627 = scalar_lea.vmem [#allocation13], %s626
        // Predicated region
        $region53: #{tpu_custom_call.1} parent=35 // pred_check
          %p628 = pneg %p180
        $region54: #{tpu_custom_call.1} parent=35 // pred_check_branch
          %630 = sbr.rel (%p628) target = $region56
        $region55: #{tpu_custom_call.1} parent=35 // pred_region
          %s632 = ssub.s32 64, 64
          %633 = vsyncadd %s614, %s632
          %s634 = sadd.s32 %s39, %s40
          %s635 = smul.addr %s38, 8
          %s636 = sadd.s32 %s634, %s635
          %s637 = smul.addr %s636, 64
          %s638 = scalar_lea.hbm %s4, %s637
          %s640 = sshll.u32 %s617, 4
          %s641 = int_to_ptr.vmem [resolvable:$true] %s640
          %643 = dma.vmem_to_hbm [thread:$0]  %s641, 64, %s638, %s614
        $region56: #{tpu_custom_call.1} parent=35 // pred_fallthru
          _
        // Predicated region
        $region57: #{tpu_custom_call.1} parent=35 // pred_check
          %p644 = pneg %p210
        $region58: #{tpu_custom_call.1} parent=35 // pred_check_branch
          %646 = sbr.rel (%p644) target = $region60
        $region59: #{tpu_custom_call.1} parent=35 // pred_region
          %s648 = ssub.s32 64, 64
          %649 = vsyncadd %s619, %s648
          %s650 = sadd.s32 %s39, %s40
          %s651 = smul.addr %s38, 8
          %s652 = sadd.s32 %s650, %s651
          %s653 = smul.addr %s652, 64
          %s654 = scalar_lea.hbm %s5, %s653
          %s656 = sshll.u32 %s622, 4
          %s657 = int_to_ptr.vmem [resolvable:$true] %s656
          %659 = dma.vmem_to_hbm [thread:$0]  %s657, 64, %s654, %s619
        $region60: #{tpu_custom_call.1} parent=35 // pred_fallthru
          _
        // Predicated region
        $region61: #{tpu_custom_call.1} parent=35 // pred_check
          %p660 = pneg %p240
        $region62: #{tpu_custom_call.1} parent=35 // pred_check_branch
          %662 = sbr.rel (%p660) target = $region64
        $region63: #{tpu_custom_call.1} parent=35 // pred_region
          %s664 = ssub.s32 64, 64
          %665 = vsyncadd %s624, %s664
          %s666 = sadd.s32 %s39, %s40
          %s667 = smul.addr %s38, 8
          %s668 = sadd.s32 %s666, %s667
          %s669 = smul.addr %s668, 64
          %s670 = scalar_lea.hbm %s6, %s669
          %s672 = sshll.u32 %s627, 4
          %s673 = int_to_ptr.vmem [resolvable:$true] %s672
          %675 = dma.vmem_to_hbm [thread:$0]  %s673, 64, %s670, %s624
        $region64: #{tpu_custom_call.1} parent=35 // pred_fallthru
          _
      $region36: #{tpu_custom_call.1} parent=5 // pred_fallthru
        _
      %p676 = scmp.le.s32.totalorder 2, %s28
      // Predicated region
      $region65: #{tpu_custom_call.1} parent=5 // pred_check
        %p677 = pneg %p676
      $region66: #{tpu_custom_call.1} parent=5 // pred_check_branch
        %679 = sbr.rel (%p677) target = $region68
      $region67: #{tpu_custom_call.1} parent=5 // pred_region
        %s680 = ssub.s32 %s28, 2
        // Predicated region
        $region69: #{tpu_custom_call.1} parent=67 // pred_check
          %p681 = pneg %p186
        $region70: #{tpu_custom_call.1} parent=67 // pred_check_branch
          %683 = sbr.rel (%p681) target = $region72
        $region71: #{tpu_custom_call.1} parent=67 // pred_region
          %s684 = sand.u32 %s171, 1
          %s685 = scalar_lea.sflag [#allocation4], %s684
          %s686 = sand.u32 %s171, 1
          %s687 = smul.addr %s686, 4
          %s688 = scalar_lea.vmem [#allocation10], %s687
          %689 = dma.done %s685, 64
        $region72: #{tpu_custom_call.1} parent=67 // pred_fallthru
          _
        // Predicated region
        $region73: #{tpu_custom_call.1} parent=67 // pred_check
          %p690 = pneg %p216
        $region74: #{tpu_custom_call.1} parent=67 // pred_check_branch
          %692 = sbr.rel (%p690) target = $region76
        $region75: #{tpu_custom_call.1} parent=67 // pred_region
          %s693 = sand.u32 %s34, 1
          %s694 = scalar_lea.sflag [#allocation12], %s693
          %s695 = sand.u32 %s201, 1
          %s696 = smul.addr %s695, 4
          %s697 = scalar_lea.vmem [#allocation11], %s696
          %698 = dma.done %s694, 64
        $region76: #{tpu_custom_call.1} parent=67 // pred_fallthru
          _
        // Predicated region
        $region77: #{tpu_custom_call.1} parent=67 // pred_check
          %p699 = pneg %p246
        $region78: #{tpu_custom_call.1} parent=67 // pred_check_branch
          %701 = sbr.rel (%p699) target = $region80
        $region79: #{tpu_custom_call.1} parent=67 // pred_region
          %s702 = sand.u32 %s34, 1
          %s703 = scalar_lea.sflag [#allocation12], %s702
          %s704 = sand.u32 %s231, 1
          %s705 = smul.addr %s704, 4
          %s706 = scalar_lea.vmem [#allocation13], %s705
          %707 = dma.done %s703, 64
        $region80: #{tpu_custom_call.1} parent=67 // pred_fallthru
          _
      $region68: #{tpu_custom_call.1} parent=5 // pred_fallthru
        _
    $region6: #{tpu_custom_call.1} parent=1 // loop_footer
      %s32 = sadd.s32 1, %s28
    $region7: #{tpu_custom_call.1} parent=1 // loop_footer_branch
      %27 = sbr.rel target = $region3
    $region8: #{tpu_custom_call.1} parent=1 // loop_exit
      _
    %708 = vsyncpa [#allocation3], 1
    %s709 = scalar_lea.sflag [#allocation3], 1
    %710 = vsyncpa %s709, 1
    %711 = vsyncpa [#allocation6], 1
    %s712 = scalar_lea.sflag [#allocation6], 1
    %713 = vsyncpa %s712, 1
    %714 = vsyncpa [#allocation9], 1
    %s715 = scalar_lea.sflag [#allocation9], 1
    %716 = vsyncpa %s715, 1
    %717 = vsyncpa [#allocation4], 1
    %s718 = scalar_lea.sflag [#allocation4], 1
    %719 = vsyncpa %s718, 1
    %720 = vsyncpa [#allocation12], 1
    %s721 = scalar_lea.sflag [#allocation12], 1
    %722 = vsyncpa %s721, 1

</llo_original>
